<compile_context>
chip_gen: v5e
topology: v5e:2x2
jax: 0.10.0
libtpu: 0.0.40
codegen_flags: <defaults>
</compile_context>

<pallas_src>
import jax
import jax.numpy as jnp
from jax import lax
from jax.experimental import pallas as pl
from jax.experimental.pallas import tpu as pltpu

_LANE = 128      # vreg lane width
_SUB = 8         # f32 vreg sublane depth
_TILE_R = 1024   # default rows-of-128 per grid step (= 128K batch elems)


def _net_kernel(p_ref, x_ref, o_ref):
    """One (feature, tile_r, 128) batch tile, walked in 1-vreg chunks.

    p_ref : SMEM f32[17] packed params:
              [0:6)   w1 (in=2, out=3) row-major:  w1[k, j] = p[3*k + j]
              [6:9)   b1
              [9:15)  w2 (in=3, out=2) row-major:  w2[k, j] = p[9 + 2*k + j]
              [15:17) b2
    x_ref : VMEM f32[2, TILE_R, 128]  input  (feature, sublane-row, lane)
    o_ref : VMEM f32[5, TILE_R, 128]  rows 0:2 = fc2 output, rows 2:5 = relu(fc1)
    """
    w = [p_ref[i] for i in range(17)]       # scalar reads, hoisted out of loop
    n_chunks = x_ref.shape[1] // _SUB       # static

    def body(c, carry):
        r = pl.multiple_of(c * _SUB, _SUB)
        rows = pl.ds(r, _SUB)
        x0 = x_ref[0, rows, :]              # (8, 128) = one f32 vreg
        x1 = x_ref[1, rows, :]
        # fc1 + ReLU: 2 mul + 2 add + max per hidden feature, pure VPU.
        h0 = jnp.maximum(x0 * w[0] + x1 * w[3] + w[6], 0.0)
        h1 = jnp.maximum(x0 * w[1] + x1 * w[4] + w[7], 0.0)
        h2 = jnp.maximum(x0 * w[2] + x1 * w[5] + w[8], 0.0)
        o_ref[2, rows, :] = h0
        o_ref[3, rows, :] = h1
        o_ref[4, rows, :] = h2
        # fc2: 3 mul + 3 add per output feature, reusing the live h vregs.
        o_ref[0, rows, :] = h0 * w[9] + h1 * w[11] + h2 * w[13] + w[15]
        o_ref[1, rows, :] = h0 * w[10] + h1 * w[12] + h2 * w[14] + w[16]
        return carry

    lax.fori_loop(0, n_chunks, body, 0)


def _pack_params(w1, b1, w2, b2):
    """Weights stored pre-transposed as (in_features, out_features)."""
    return jnp.concatenate([
        jnp.asarray(w1, jnp.float32).reshape(-1),   # 6
        jnp.asarray(b1, jnp.float32).reshape(-1),   # 3
        jnp.asarray(w2, jnp.float32).reshape(-1),   # 6
        jnp.asarray(b2, jnp.float32).reshape(-1),   # 2
    ])


def net_forward_packed(xt, params, *, tile_r=_TILE_R):
    """Lane/sublane-dense fast path (no layout copies).

    xt     : f32[2, R, 128]  activations, (feature, sublane-row, lane)
    params : f32[17]         packed fc1/fc2 weights + biases
    returns: f32[5, R, 128]  rows 0:2 = fc2(x), rows 2:5 = relu(fc1(x))
    """
    feat, R, lane = xt.shape
    assert feat == 2 and lane == _LANE and R % _SUB == 0, xt.shape
    tile_r = max(_SUB, (min(int(tile_r), R) // _SUB) * _SUB)
    n_tiles = pl.cdiv(R, tile_r)

    return pl.pallas_call(
        _net_kernel,
        out_shape=jax.ShapeDtypeStruct((5, R, _LANE), jnp.float32),
        grid=(n_tiles,),
        in_specs=[
            pl.BlockSpec(memory_space=pltpu.MemorySpace.SMEM),       # params
            pl.BlockSpec((2, tile_r, _LANE), lambda i: (0, i, 0)),   # x tile
        ],
        out_specs=pl.BlockSpec((5, tile_r, _LANE), lambda i: (0, i, 0)),
        compiler_params=pltpu.CompilerParams(
            dimension_semantics=("parallel",),      # megacore / v7x 2-TC split
            vmem_limit_bytes=32 * 1024 * 1024,      # plenty for ~7 MiB footprint
        ),
    )(params, xt)


def net_forward(x, w1, b1, w2, b2, *, tile_r=_TILE_R):
    """Torch-layout adapter: x (B, 2) -> (fc2 (B, 2), relu(fc1) (B, 3)).

    The transpose/pad/slice below is wrapper-side layout plumbing only; callers
    that can own the (feature, row, 128) layout should use net_forward_packed.
    """
    B = x.shape[0]
    rows = pl.cdiv(B, _LANE)
    tile_r = max(_SUB, (int(tile_r) // _SUB) * _SUB)          # lane/sublane safe
    tile_r = min(tile_r, pl.cdiv(rows, _SUB) * _SUB)
    n_tiles = pl.cdiv(rows, tile_r)
    Rp = n_tiles * tile_r
    Bp = Rp * _LANE

    xt = jnp.asarray(x, jnp.float32).T                        # (2, B)
    xt = jnp.pad(xt, ((0, 0), (0, Bp - B)))                   # batch-tail pad
    xt = xt.reshape(2, Rp, _LANE)

    params = _pack_params(w1, b1, w2, b2)
    fused = net_forward_packed(xt, params, tile_r=tile_r)     # (5, Rp, 128)

    flat = fused.reshape(5, Bp)
    # Pad rows hold relu(b1) / fc2(relu(b1)); slice them off before returning.
    y = flat[0:2, :B].T
    out = flat[2:5, :B].T
    return y, out


def init_params(key):
    """Deterministic init matching nn.Linear shapes, stored as (in, out)."""
    k1, k2, k3, k4 = jax.random.split(key, 4)
    lim1 = 1.0 / jnp.sqrt(2.0)
    lim2 = 1.0 / jnp.sqrt(3.0)
    w1 = jax.random.uniform(k1, (2, 3), jnp.float32, -lim1, lim1)
    b1 = jax.random.uniform(k2, (3,), jnp.float32, -lim1, lim1)
    w2 = jax.random.uniform(k3, (3, 2), jnp.float32, -lim2, lim2)
    b2 = jax.random.uniform(k4, (2,), jnp.float32, -lim2, lim2)
    return w1, b1, w2, b2


if __name__ == "__main__":
    key = jax.random.PRNGKey(0)
    kx1, kx2, kp = jax.random.split(key, 3)
    w1, b1, w2, b2 = init_params(kp)

    def ref_forward(xv):
        out_r = jnp.maximum(xv @ w1 + b1, 0.0)
        return out_r @ w2 + b2, out_r

    # Small demo batch (fc1 expects 2 input features).
    B = 8
    x = jax.random.normal(kx1, (B, 2), jnp.float32)
    y, out = net_forward(x, w1, b1, w2, b2)
    jax.block_until_ready((y, out))
    y_ref, out_ref = ref_forward(x)
    assert y.shape == (B, 2) and out.shape == (B, 3)
    assert jnp.allclose(out, out_ref, atol=1e-5), "relu(fc1) output mismatch"
    assert jnp.allclose(y, y_ref, atol=1e-5), "fc2 output mismatch"

    # Second check: non-multiple-of-128 batch with a small tile so the
    # multi-tile grid, multi-chunk inner loop and padded-tail paths all run.
    B2 = 2500
    x2 = jax.random.normal(kx2, (B2, 2), jnp.float32)
    y2, out2 = net_forward(x2, w1, b1, w2, b2, tile_r=16)
    jax.block_until_ready((y2, out2))
    y2_ref, out2_ref = ref_forward(x2)
    assert jnp.allclose(out2, out2_ref, atol=1e-5), "relu(fc1) mismatch (B=2500)"
    assert jnp.allclose(y2, y2_ref, atol=1e-5), "fc2 mismatch (B=2500)"

    # TODO(synk): Net.predict (softmax + argmax over `out`) is host-side logic
    # in the torch module and is not part of forward(); not implemented here.
    print("KERNEL_OK")
</pallas_src>

<mosaic_0001>
module attributes {stable_mosaic.version = 11 : i64} {
  func.func @_net_kernel(%arg0: i32, %arg1: memref<17xf32, #tpu.memory_space<smem>>, %arg2: memref<2x8x128xf32, #tpu.memory_space<vmem>>, %arg3: memref<5x8x128xf32, #tpu.memory_space<vmem>>) attributes {dimension_semantics = [#tpu.dimension_semantics<parallel>], iteration_bounds = array<i64: 1>, scalar_prefetch = 0 : i64, scratch_operands = 0 : i64, tpu.core_type = #tpu.core_type<tc>, window_params = [{transform_indices = @transform_0, window_bounds = array<i64: 17>}, {transform_indices = @transform_1, window_bounds = array<i64: 2, 8, 128>}, {transform_indices = @transform_2, window_bounds = array<i64: 5, 8, 128>}]} {
    %c0 = arith.constant 0 : index
    %0 = memref.load %arg1[%c0] : memref<17xf32, #tpu.memory_space<smem>>
    %c1 = arith.constant 1 : index
    %1 = memref.load %arg1[%c1] : memref<17xf32, #tpu.memory_space<smem>>
    %c2 = arith.constant 2 : index
    %2 = memref.load %arg1[%c2] : memref<17xf32, #tpu.memory_space<smem>>
    %c3 = arith.constant 3 : index
    %3 = memref.load %arg1[%c3] : memref<17xf32, #tpu.memory_space<smem>>
    %c4 = arith.constant 4 : index
    %4 = memref.load %arg1[%c4] : memref<17xf32, #tpu.memory_space<smem>>
    %c5 = arith.constant 5 : index
    %5 = memref.load %arg1[%c5] : memref<17xf32, #tpu.memory_space<smem>>
    %c6 = arith.constant 6 : index
    %6 = memref.load %arg1[%c6] : memref<17xf32, #tpu.memory_space<smem>>
    %c7 = arith.constant 7 : index
    %7 = memref.load %arg1[%c7] : memref<17xf32, #tpu.memory_space<smem>>
    %c8 = arith.constant 8 : index
    %8 = memref.load %arg1[%c8] : memref<17xf32, #tpu.memory_space<smem>>
    %c9 = arith.constant 9 : index
    %9 = memref.load %arg1[%c9] : memref<17xf32, #tpu.memory_space<smem>>
    %c10 = arith.constant 10 : index
    %10 = memref.load %arg1[%c10] : memref<17xf32, #tpu.memory_space<smem>>
    %c11 = arith.constant 11 : index
    %11 = memref.load %arg1[%c11] : memref<17xf32, #tpu.memory_space<smem>>
    %c12 = arith.constant 12 : index
    %12 = memref.load %arg1[%c12] : memref<17xf32, #tpu.memory_space<smem>>
    %c13 = arith.constant 13 : index
    %13 = memref.load %arg1[%c13] : memref<17xf32, #tpu.memory_space<smem>>
    %c14 = arith.constant 14 : index
    %14 = memref.load %arg1[%c14] : memref<17xf32, #tpu.memory_space<smem>>
    %c15 = arith.constant 15 : index
    %15 = memref.load %arg1[%c15] : memref<17xf32, #tpu.memory_space<smem>>
    %c16 = arith.constant 16 : index
    %16 = memref.load %arg1[%c16] : memref<17xf32, #tpu.memory_space<smem>>
    %c0_i32 = arith.constant 0 : i32
    %c8_i32 = arith.constant 8 : i32
    %17 = arith.muli %c0_i32, %c8_i32 : i32
    %18 = tpu.assume_multiple %17, 8 : i32
    %c0_0 = arith.constant 0 : index
    %19 = arith.index_cast %18 : i32 to index
    %c0_1 = arith.constant 0 : index
    %20 = vector.load %arg2[%c0_0, %19, %c0_1] : memref<2x8x128xf32, #tpu.memory_space<vmem>>, vector<1x8x128xf32>
    %21 = vector.shape_cast %20 : vector<1x8x128xf32> to vector<8x128xf32>
    %c1_2 = arith.constant 1 : index
    %22 = arith.index_cast %18 : i32 to index
    %c0_3 = arith.constant 0 : index
    %23 = vector.load %arg2[%c1_2, %22, %c0_3] : memref<2x8x128xf32, #tpu.memory_space<vmem>>, vector<1x8x128xf32>
    %24 = vector.shape_cast %23 : vector<1x8x128xf32> to vector<8x128xf32>
    %25 = vector.broadcast %0 : f32 to vector<8x128xf32>
    %26 = arith.mulf %21, %25 : vector<8x128xf32>
    %27 = vector.broadcast %3 : f32 to vector<8x128xf32>
    %28 = arith.mulf %24, %27 : vector<8x128xf32>
    %29 = arith.addf %26, %28 : vector<8x128xf32>
    %30 = vector.broadcast %6 : f32 to vector<8x128xf32>
    %31 = arith.addf %29, %30 : vector<8x128xf32>
    %cst = arith.constant 0.000000e+00 : f32
    %32 = vector.broadcast %cst : f32 to vector<8x128xf32>
    %33 = arith.maximumf %31, %32 : vector<8x128xf32>
    %34 = vector.broadcast %1 : f32 to vector<8x128xf32>
    %35 = arith.mulf %21, %34 : vector<8x128xf32>
    %36 = vector.broadcast %4 : f32 to vector<8x128xf32>
    %37 = arith.mulf %24, %36 : vector<8x128xf32>
    %38 = arith.addf %35, %37 : vector<8x128xf32>
    %39 = vector.broadcast %7 : f32 to vector<8x128xf32>
    %40 = arith.addf %38, %39 : vector<8x128xf32>
    %cst_4 = arith.constant 0.000000e+00 : f32
    %41 = vector.broadcast %cst_4 : f32 to vector<8x128xf32>
    %42 = arith.maximumf %40, %41 : vector<8x128xf32>
    %43 = vector.broadcast %2 : f32 to vector<8x128xf32>
    %44 = arith.mulf %21, %43 : vector<8x128xf32>
    %45 = vector.broadcast %5 : f32 to vector<8x128xf32>
    %46 = arith.mulf %24, %45 : vector<8x128xf32>
    %47 = arith.addf %44, %46 : vector<8x128xf32>
    %48 = vector.broadcast %8 : f32 to vector<8x128xf32>
    %49 = arith.addf %47, %48 : vector<8x128xf32>
    %cst_5 = arith.constant 0.000000e+00 : f32
    %50 = vector.broadcast %cst_5 : f32 to vector<8x128xf32>
    %51 = arith.maximumf %49, %50 : vector<8x128xf32>
    %c2_6 = arith.constant 2 : index
    %52 = arith.index_cast %18 : i32 to index
    %c0_7 = arith.constant 0 : index
    %53 = vector.load %arg3[%c2_6, %52, %c0_7] : memref<5x8x128xf32, #tpu.memory_space<vmem>>, vector<1x8x128xf32>
    %54 = vector.shape_cast %53 : vector<1x8x128xf32> to vector<8x128xf32>
    %55 = vector.shape_cast %33 : vector<8x128xf32> to vector<1x8x128xf32>
    tpu.vector_store %arg3[%c2_6, %52, %c0_7], %55 {strides = array<i32>} : memref<5x8x128xf32, #tpu.memory_space<vmem>>, vector<1x8x128xf32>,
    %c3_8 = arith.constant 3 : index
    %56 = arith.index_cast %18 : i32 to index
    %c0_9 = arith.constant 0 : index
    %57 = vector.load %arg3[%c3_8, %56, %c0_9] : memref<5x8x128xf32, #tpu.memory_space<vmem>>, vector<1x8x128xf32>
    %58 = vector.shape_cast %57 : vector<1x8x128xf32> to vector<8x128xf32>
    %59 = vector.shape_cast %42 : vector<8x128xf32> to vector<1x8x128xf32>
    tpu.vector_store %arg3[%c3_8, %56, %c0_9], %59 {strides = array<i32>} : memref<5x8x128xf32, #tpu.memory_space<vmem>>, vector<1x8x128xf32>,
    %c4_10 = arith.constant 4 : index
    %60 = arith.index_cast %18 : i32 to index
    %c0_11 = arith.constant 0 : index
    %61 = vector.load %arg3[%c4_10, %60, %c0_11] : memref<5x8x128xf32, #tpu.memory_space<vmem>>, vector<1x8x128xf32>
    %62 = vector.shape_cast %61 : vector<1x8x128xf32> to vector<8x128xf32>
    %63 = vector.shape_cast %51 : vector<8x128xf32> to vector<1x8x128xf32>
    tpu.vector_store %arg3[%c4_10, %60, %c0_11], %63 {strides = array<i32>} : memref<5x8x128xf32, #tpu.memory_space<vmem>>, vector<1x8x128xf32>,
    %64 = vector.broadcast %9 : f32 to vector<8x128xf32>
    %65 = arith.mulf %33, %64 : vector<8x128xf32>
    %66 = vector.broadcast %11 : f32 to vector<8x128xf32>
    %67 = arith.mulf %42, %66 : vector<8x128xf32>
    %68 = arith.addf %65, %67 : vector<8x128xf32>
    %69 = vector.broadcast %13 : f32 to vector<8x128xf32>
    %70 = arith.mulf %51, %69 : vector<8x128xf32>
    %71 = arith.addf %68, %70 : vector<8x128xf32>
    %72 = vector.broadcast %15 : f32 to vector<8x128xf32>
    %73 = arith.addf %71, %72 : vector<8x128xf32>
    %c0_12 = arith.constant 0 : index
    %74 = arith.index_cast %18 : i32 to index
    %c0_13 = arith.constant 0 : index
    %75 = vector.load %arg3[%c0_12, %74, %c0_13] : memref<5x8x128xf32, #tpu.memory_space<vmem>>, vector<1x8x128xf32>
    %76 = vector.shape_cast %75 : vector<1x8x128xf32> to vector<8x128xf32>
    %77 = vector.shape_cast %73 : vector<8x128xf32> to vector<1x8x128xf32>
    tpu.vector_store %arg3[%c0_12, %74, %c0_13], %77 {strides = array<i32>} : memref<5x8x128xf32, #tpu.memory_space<vmem>>, vector<1x8x128xf32>,
    %78 = vector.broadcast %10 : f32 to vector<8x128xf32>
    %79 = arith.mulf %33, %78 : vector<8x128xf32>
    %80 = vector.broadcast %12 : f32 to vector<8x128xf32>
    %81 = arith.mulf %42, %80 : vector<8x128xf32>
    %82 = arith.addf %79, %81 : vector<8x128xf32>
    %83 = vector.broadcast %14 : f32 to vector<8x128xf32>
    %84 = arith.mulf %51, %83 : vector<8x128xf32>
    %85 = arith.addf %82, %84 : vector<8x128xf32>
    %86 = vector.broadcast %16 : f32 to vector<8x128xf32>
    %87 = arith.addf %85, %86 : vector<8x128xf32>
    %c1_14 = arith.constant 1 : index
    %88 = arith.index_cast %18 : i32 to index
    %c0_15 = arith.constant 0 : index
    %89 = vector.load %arg3[%c1_14, %88, %c0_15] : memref<5x8x128xf32, #tpu.memory_space<vmem>>, vector<1x8x128xf32>
    %90 = vector.shape_cast %89 : vector<1x8x128xf32> to vector<8x128xf32>
    %91 = vector.shape_cast %87 : vector<8x128xf32> to vector<1x8x128xf32>
    tpu.vector_store %arg3[%c1_14, %88, %c0_15], %91 {strides = array<i32>} : memref<5x8x128xf32, #tpu.memory_space<vmem>>, vector<1x8x128xf32>,
    %c1_i32 = arith.constant 1 : i32
    return
  }
  func.func @transform_0(%arg0: i32) -> i32 {
    %c0_i32 = arith.constant 0 : i32
    %c0_i32_0 = arith.constant 0 : i32
    return %c0_i32 : i32
  }
  func.func @transform_1(%arg0: i32) -> (i32, i32, i32) {
    %c0_i32 = arith.constant 0 : i32
    %c0_i32_0 = arith.constant 0 : i32
    %c0_i32_1 = arith.constant 0 : i32
    return %c0_i32, %arg0, %c0_i32_0 : i32, i32, i32
  }
  func.func @transform_2(%arg0: i32) -> (i32, i32, i32) {
    %c0_i32 = arith.constant 0 : i32
    %c0_i32_0 = arith.constant 0 : i32
    %c0_i32_1 = arith.constant 0 : i32
    return %c0_i32, %arg0, %c0_i32_0 : i32, i32, i32
  }
}

</mosaic_0001>

<llo_original>
// kernel: tpu_custom_call.1
$region0: #{tpu_custom_call.1}
  #allocation0 [shape = 'u32[]', space=smem, size = 0x4, offset = 0x4, fixed_abs, tag = 'smem constant byte address 0x4 - core index']
  #allocation1 [shape = 'u32[72,128]{1,0:T(1,128)}', space=vmem, size = 0x9000, scoped, tag = 'internal scratch']
  %s0 = inlined_call_operand.hbm [shape: f32[17], index: 0, kind: input, shape index: {}]
  %s1 = inlined_call_operand.hbm [shape: f32[2,8,128], index: 1, kind: input, shape index: {}]
  %s2 = inlined_call_operand.hbm [shape: f32[5,8,128], index: 2, kind: output, shape index: {}]
  %s3 = sld [smem:[#allocation0]]
  $region26: #{tpu_custom_call.1} parent=0
    _
  %s5 = ssub.s32 1, %s3
  %s6 = scalar_select 0, %s5, %s3
  $region1: #{tpu_custom_call.1} parent=0
    #allocation2 [shape = 'u8[512]{0}', space=smem, size = 0x200, scoped, tag = 'input window, operand 0, single buffered']
    #allocation3 [shape = 's32[1]{0}', space=sflag, size = 0x4, scoped, tag = 'scoped memory for tpu_custom_call.1']
    #allocation4 [shape = 's32[1]{0}', space=sflag, size = 0x4, scoped, tag = 'scoped memory for tpu_custom_call.1']
    #allocation5 [shape = 's32[1]{0}', space=sflag, size = 0x4, scoped, tag = 'scoped memory for tpu_custom_call.1']
    #allocation6 [shape = 'u8[8192]{0}', space=vmem, size = 0x2000, scoped, tag = 'input window, operand 1, single buffered']
    #allocation7 [shape = 'u8[20480]{0}', space=vmem, size = 0x5000, scoped, tag = 'output window, operand 0, single buffered']
    %7 = vsyncpa [#allocation5], 0
    %8 = vsyncpa [#allocation3], 0
    %9 = vsyncpa [#allocation4], 0
    // Predicated region
    $region2: #{tpu_custom_call.1} parent=1 // pred_check
      _
    $region3: #{tpu_custom_call.1} parent=1 // pred_check_branch
      %11 = sbr.rel (0) target = $region5
    $region4: #{tpu_custom_call.1} parent=1 // pred_region
      %13 = vsyncadd [#allocation5], 0
      %s15 = sshll.u32 %s0, 4
      %s16 = int_to_ptr.hbm [resolvable:$true] %s15
      %18 = dma.hbm_to_smem %s16, 16, [#allocation2], [#allocation5]
    $region5: #{tpu_custom_call.1} parent=1 // pred_fallthru
      _
    // Predicated region
    $region6: #{tpu_custom_call.1} parent=1 // pred_check
      _
    $region7: #{tpu_custom_call.1} parent=1 // pred_check_branch
      %20 = sbr.rel (0) target = $region9
    $region8: #{tpu_custom_call.1} parent=1 // pred_region
      %22 = vsyncadd [#allocation3], 0
      %s23 = sshll.u32 %s1, 4
      %s24 = int_to_ptr.hbm [resolvable:$true] %s23
      %s25 = sshll.u32 [#allocation6], 4
      %s26 = int_to_ptr.vmem [resolvable:$true] %s25
      %31 = dma.hbm_to_vmem [thread:$0]  %s24, 256, %s26, [#allocation3], 128, 128, 8
    $region9: #{tpu_custom_call.1} parent=1 // pred_fallthru
      _
    // Predicated region
    $region10: #{tpu_custom_call.1} parent=1 // pred_check
      _
    $region11: #{tpu_custom_call.1} parent=1 // pred_check_branch
      %33 = sbr.rel (0) target = $region13
    $region12: #{tpu_custom_call.1} parent=1 // pred_region
      %35 = dma.done [#allocation5], 16
    $region13: #{tpu_custom_call.1} parent=1 // pred_fallthru
      _
    // Predicated region
    $region14: #{tpu_custom_call.1} parent=1 // pred_check
      _
    $region15: #{tpu_custom_call.1} parent=1 // pred_check_branch
      %37 = sbr.rel (0) target = $region17
    $region16: #{tpu_custom_call.1} parent=1 // pred_region
      %39 = dma.done [#allocation3], 256
    $region17: #{tpu_custom_call.1} parent=1 // pred_fallthru
      _
    %40 = sfence
    %s41 = sld [smem:[#allocation2]]
    %s42 = sld [smem:[#allocation2 + $0x1]]
    %s43 = sld [smem:[#allocation2 + $0x2]]
    %s44 = sld [smem:[#allocation2 + $0x3]]
    %s45 = sld [smem:[#allocation2 + $0x4]]
    %s46 = sld [smem:[#allocation2 + $0x5]]
    %s47 = sld [smem:[#allocation2 + $0x6]]
    %s48 = sld [smem:[#allocation2 + $0x7]]
    %s49 = sld [smem:[#allocation2 + $0x8]]
    %s50 = sld [smem:[#allocation2 + $0x9]]
    %s51 = sld [smem:[#allocation2 + $0xa]]
    %s52 = sld [smem:[#allocation2 + $0xb]]
    %s53 = sld [smem:[#allocation2 + $0xc]]
    %s54 = sld [smem:[#allocation2 + $0xd]]
    %s55 = sld [smem:[#allocation2 + $0xe]]
    %s56 = sld [smem:[#allocation2 + $0xf]]
    %s57 = sld [smem:[#allocation2 + $0x10]]
    %v58 = vld [vmem:[#allocation6] sm:$0xff]
    %s59 = sadd.s32 0, 8
    %s60 = scalar_lea.vmem [#allocation6], %s59
    %v61 = vld [vmem:[%s60] sm:$0xff]
    %v62 = vstv %s41
    %v63 = vmul.f32 %v58, %v62
    %v64 = vstv %s44
    %v65 = vmul.f32 %v61, %v64
    %v66 = vadd.f32 %v63, %v65
    %v67 = vstv %s47
    %v68 = vadd.f32 %v66, %v67
    %v69 = vmax.f32 %v68, 0.0
    %v70 = vstv %s42
    %v71 = vmul.f32 %v58, %v70
    %v72 = vstv %s45
    %v73 = vmul.f32 %v61, %v72
    %v74 = vadd.f32 %v71, %v73
    %v75 = vstv %s48
    %v76 = vadd.f32 %v74, %v75
    %v77 = vmax.f32 %v76, 0.0
    %v78 = vstv %s43
    %v79 = vmul.f32 %v58, %v78
    %v80 = vstv %s46
    %v81 = vmul.f32 %v61, %v80
    %v82 = vadd.f32 %v79, %v81
    %v83 = vstv %s49
    %v84 = vadd.f32 %v82, %v83
    %v85 = vmax.f32 %v84, 0.0
    %s86 = sadd.s32 0, 16
    %s87 = scalar_lea.vmem [#allocation7], %s86
    %88 = vst [vmem:[%s87] sm:$0xff] %v69
    %s89 = sadd.s32 0, 24
    %s90 = scalar_lea.vmem [#allocation7], %s89
    %91 = vst [vmem:[%s90] sm:$0xff] %v77
    %s92 = sadd.s32 0, 32
    %s93 = scalar_lea.vmem [#allocation7], %s92
    %94 = vst [vmem:[%s93] sm:$0xff] %v85
    %v95 = vstv %s50
    %v96 = vmul.f32 %v69, %v95
    %v97 = vstv %s52
    %v98 = vmul.f32 %v77, %v97
    %v99 = vadd.f32 %v96, %v98
    %v100 = vstv %s54
    %v101 = vmul.f32 %v85, %v100
    %v102 = vadd.f32 %v99, %v101
    %v103 = vstv %s56
    %v104 = vadd.f32 %v102, %v103
    %105 = vst [vmem:[#allocation7] sm:$0xff] %v104
    %v106 = vstv %s51
    %v107 = vmul.f32 %v69, %v106
    %v108 = vstv %s53
    %v109 = vmul.f32 %v77, %v108
    %v110 = vadd.f32 %v107, %v109
    %v111 = vstv %s55
    %v112 = vmul.f32 %v85, %v111
    %v113 = vadd.f32 %v110, %v112
    %v114 = vstv %s57
    %v115 = vadd.f32 %v113, %v114
    %s116 = scalar_lea.vmem [#allocation7], %s59
    %117 = vst [vmem:[%s116] sm:$0xff] %v115
    // Predicated region
    $region18: #{tpu_custom_call.1} parent=1 // pred_check
      _
    $region19: #{tpu_custom_call.1} parent=1 // pred_check_branch
      %119 = sbr.rel (0) target = $region21
    $region20: #{tpu_custom_call.1} parent=1 // pred_region
      %121 = vsyncadd [#allocation4], 0
      %s122 = sshll.u32 [#allocation7], 4
      %s123 = int_to_ptr.vmem [resolvable:$true] %s122
      %s124 = sshll.u32 %s2, 4
      %s125 = int_to_ptr.hbm [resolvable:$true] %s124
      %130 = dma.vmem_to_hbm [thread:$0]  %s123, 640, %s125, [#allocation4], 128, 128, 8
    $region21: #{tpu_custom_call.1} parent=1 // pred_fallthru
      _
    // Predicated region
    $region22: #{tpu_custom_call.1} parent=1 // pred_check
      _
    $region23: #{tpu_custom_call.1} parent=1 // pred_check_branch
      %132 = sbr.rel (0) target = $region25
    $region24: #{tpu_custom_call.1} parent=1 // pred_region
      %134 = dma.done [#allocation4], 640
    $region25: #{tpu_custom_call.1} parent=1 // pred_fallthru
      _
    %135 = vsyncpa [#allocation3], 1
    %136 = vsyncpa [#allocation4], 1
    %137 = vsyncpa [#allocation5], 1

</llo_original>
